<compile_context>
chip_gen: v6e
topology: v6e:2x2x1
jax: 0.10.0
libtpu: 0.0.40
codegen_flags: <defaults>
</compile_context>

<pallas_src>
import functools

import jax
import jax.numpy as jnp
from jax.experimental import pallas as pl
from jax.experimental.pallas import tpu as pltpu

NUM_CLASSES = 20


def _unbalance_loss_kernel(x_ref, lab_ref, o_ref, *, n_total):
    # x_ref   : VMEM (T, C)     logits block, native HBM layout
    # lab_ref : VMEM (1, T)     int32 labels block
    # o_ref   : VMEM (1, 8, 128) f32 per-tile partial (scalar broadcast)
    i = pl.program_id(0)

    # Per-tile transpose in VMEM -> lane-dense compute layout
    # (classes on sublanes, samples on the 128-lane axis).
    x = x_ref[...].astype(jnp.float32)             # (T, C)
    xt = jnp.transpose(x)                          # (C, T)
    lab = lab_ref[...]                             # (1, T) int32
    c, t = xt.shape

    row = jax.lax.broadcasted_iota(jnp.int32, (c, t), 0)            # class id
    col = jax.lax.broadcasted_iota(jnp.int32, (1, t), 1) + i * t    # global sample idx
    valid = col < n_total                                           # ragged-tail mask

    # log-softmax pieces (per column == per sample)
    m = jnp.max(xt, axis=0, keepdims=True)                           # (1, T)
    lse = jnp.log(jnp.sum(jnp.exp(xt - m), axis=0, keepdims=True))   # (1, T)

    # x[label] via masked sum (single reused iota)
    x_lab = jnp.sum(jnp.where(row == lab, xt, jnp.float32(0.0)),
                    axis=0, keepdims=True)                           # (1, T)

    # (argmax(x) > label) <=> no index j <= label attains the max
    max_le = jnp.max(jnp.where(row <= lab, xt, jnp.float32(-jnp.inf)),
                     axis=0, keepdims=True)                          # (1, T)
    w_row = (max_le < m).astype(jnp.float32) + jnp.float32(1.0 / 49.0)

    # SELECT (not multiply) so garbage tail columns (Inf/NaN) contribute exactly 0
    ce = jnp.where(valid, (m + lse - x_lab) * w_row, jnp.float32(0.0))  # (1, T)

    part = jnp.sum(ce)                                               # tile partial
    o_ref[...] = jnp.zeros(o_ref.shape, jnp.float32) + part


def my_unbalance_loss1(output, label, weight, tile_n=16384):
    """output: (N, 20) logits (any float dtype), label: (N,) int, weight: scalar."""
    n, c = output.shape
    assert c == NUM_CLASSES

    # Lane-aligned tiling; never let a block exceed the array extent except for
    # the standard ragged final block.
    n_lane = (n // 128) * 128
    if n_lane == 0:
        tile_n = n                                  # single full-extent block
    else:
        tile_n = pl.cdiv(max(int(tile_n), 128), 128) * 128
        tile_n = min(tile_n, n_lane)
    num_tiles = pl.cdiv(n, tile_n)

    labels2d = label.astype(jnp.int32).reshape(1, n)   # free relabel, no copy

    dtype_bytes = jnp.dtype(output.dtype).itemsize
    cost = pl.CostEstimate(
        flops=12 * n * c,
        transcendentals=n * (c + 1),
        bytes_accessed=n * c * dtype_bytes + n * 4 + num_tiles * 8 * 128 * 4,
    )

    kernel = functools.partial(_unbalance_loss_kernel, n_total=n)

    partials = pl.pallas_call(
        kernel,
        out_shape=jax.ShapeDtypeStruct((num_tiles, 8, 128), jnp.float32),
        grid=(num_tiles,),
        in_specs=[
            pl.BlockSpec((tile_n, c), lambda i: (i, 0)),   # native (N, 20) logits blocks
            pl.BlockSpec((1, tile_n), lambda i: (0, i)),   # labels blocks
        ],
        out_specs=pl.BlockSpec((1, 8, 128), lambda i: (i, 0, 0)),
        compiler_params=pltpu.CompilerParams(
            dimension_semantics=("parallel",),      # independent per-tile partials
            vmem_limit_bytes=48 * 1024 * 1024,
        ),
        cost_estimate=cost,
    )(output, labels2d)

    # Tiny finish: one value per tile, then the scalar module weight.
    return jnp.sum(partials[:, 0, 0]) * jnp.float32(weight)


def _reference(output, label, weight):
    pred = jnp.argmax(output, axis=1)
    w_row = (pred > label).astype(jnp.float32)[:, None] + 1.0 / 49.0
    one_hot = jax.nn.one_hot(label, NUM_CLASSES, dtype=jnp.float32)
    logp = jax.nn.log_softmax(output, axis=1)
    return jnp.sum(-one_hot * logp * w_row * weight)


if __name__ == "__main__":
    key = jax.random.PRNGKey(0)
    k1, k2, k3, k4 = jax.random.split(key, 4)

    MODULE_WEIGHT = 2.0  # deterministic "self.weight"

    # 1) tiny batch (single full-extent block, no ragged tail)
    N1 = 8
    out1 = jax.random.normal(k1, (N1, NUM_CLASSES), dtype=jnp.float32)
    lab1 = jax.random.randint(k2, (N1,), 0, NUM_CLASSES, dtype=jnp.int32)
    loss1 = my_unbalance_loss1(out1, lab1, MODULE_WEIGHT)
    jax.block_until_ready(loss1)
    ref1 = _reference(out1, lab1, MODULE_WEIGHT)
    assert jnp.allclose(loss1, ref1, rtol=1e-5, atol=1e-5), (loss1, ref1)

    # 2) multi-tile grid + ragged final block (no padding anywhere)
    N2 = 300
    out2 = jax.random.normal(k3, (N2, NUM_CLASSES), dtype=jnp.float32)
    lab2 = jax.random.randint(k4, (N2,), 0, NUM_CLASSES, dtype=jnp.int32)
    loss2 = my_unbalance_loss1(out2, lab2, MODULE_WEIGHT, tile_n=128)
    jax.block_until_ready(loss2)
    ref2 = _reference(out2, lab2, MODULE_WEIGHT)
    assert jnp.allclose(loss2, ref2, rtol=1e-5, atol=1e-4), (loss2, ref2)

    print("KERNEL_OK")
</pallas_src>

<mosaic_0001>
module attributes {stable_mosaic.version = 11 : i64} {
  func.func @_unbalance_loss_kernel(%arg0: i32, %arg1: memref<8x20xf32, #tpu.memory_space<vmem>>, %arg2: memref<1x8xi32, #tpu.memory_space<vmem>>, %arg3: memref<1x8x128xf32, #tpu.memory_space<vmem>>) attributes {dimension_semantics = [#tpu.dimension_semantics<parallel>], iteration_bounds = array<i64: 1>, scalar_prefetch = 0 : i64, scratch_operands = 0 : i64, tpu.core_type = #tpu.core_type<tc>, window_params = [{transform_indices = @transform_0, window_bounds = array<i64: 8, 20>}, {transform_indices = @transform_1, window_bounds = array<i64: 1, 8>}, {transform_indices = @transform_2, window_bounds = array<i64: 1, 8, 128>}]} {
    %c0 = arith.constant 0 : index
    %c0_0 = arith.constant 0 : index
    %0 = vector.load %arg1[%c0, %c0_0] : memref<8x20xf32, #tpu.memory_space<vmem>>, vector<8x20xf32>
    %1 = tpu.transpose %0, [1, 0] : vector<8x20xf32> -> vector<20x8xf32>
    %c0_1 = arith.constant 0 : index
    %c0_2 = arith.constant 0 : index
    %2 = vector.load %arg2[%c0_1, %c0_2] : memref<1x8xi32, #tpu.memory_space<vmem>>, vector<1x8xi32>
    %3 = tpu.iota {dimensions = array<i32: 0>} : vector<20x8xi32>
    %4 = tpu.iota {dimensions = array<i32: 1>} : vector<1x8xi32>
    %c8_i32 = arith.constant 8 : i32
    %5 = arith.muli %arg0, %c8_i32 : i32
    %6 = vector.broadcast %5 : i32 to vector<1x8xi32>
    %7 = arith.addi %4, %6 : vector<1x8xi32>
    %c8_i32_3 = arith.constant 8 : i32
    %8 = vector.broadcast %c8_i32_3 : i32 to vector<1x8xi32>
    %9 = arith.cmpi slt, %7, %8 : vector<1x8xi32>
    %cst = arith.constant dense<0xFF800000> : vector<8xf32>
    %10 = vector.multi_reduction <maximumf>, %1, %cst [0] : vector<20x8xf32> to vector<8xf32>
    %11 = vector.shape_cast %10 : vector<8xf32> to vector<1x8xf32>
    %12 = vector.broadcast %11 : vector<1x8xf32> to vector<20x8xf32>
    %13 = arith.subf %1, %12 : vector<20x8xf32>
    %14 = math.exp %13 : vector<20x8xf32>
    %cst_4 = arith.constant dense<0.000000e+00> : vector<8xf32>
    %15 = vector.multi_reduction <add>, %14, %cst_4 [0] : vector<20x8xf32> to vector<8xf32>
    %16 = vector.shape_cast %15 : vector<8xf32> to vector<1x8xf32>
    %17 = math.log %16 : vector<1x8xf32>
    %18 = vector.broadcast %2 : vector<1x8xi32> to vector<20x8xi32>
    %19 = arith.cmpi eq, %3, %18 : vector<20x8xi32>
    %cst_5 = arith.constant 0.000000e+00 : f32
    %20 = vector.broadcast %cst_5 : f32 to vector<20x8xf32>
    %21 = arith.select %19, %1, %20 : vector<20x8xi1>, vector<20x8xf32>
    %cst_6 = arith.constant dense<0.000000e+00> : vector<8xf32>
    %22 = vector.multi_reduction <add>, %21, %cst_6 [0] : vector<20x8xf32> to vector<8xf32>
    %23 = vector.shape_cast %22 : vector<8xf32> to vector<1x8xf32>
    %24 = vector.broadcast %2 : vector<1x8xi32> to vector<20x8xi32>
    %25 = arith.cmpi sle, %3, %24 : vector<20x8xi32>
    %cst_7 = arith.constant 0xFF800000 : f32
    %26 = vector.broadcast %cst_7 : f32 to vector<20x8xf32>
    %27 = arith.select %25, %1, %26 : vector<20x8xi1>, vector<20x8xf32>
    %cst_8 = arith.constant dense<0xFF800000> : vector<8xf32>
    %28 = vector.multi_reduction <maximumf>, %27, %cst_8 [0] : vector<20x8xf32> to vector<8xf32>
    %29 = vector.shape_cast %28 : vector<8xf32> to vector<1x8xf32>
    %30 = arith.cmpf olt, %29, %11 : vector<1x8xf32>
    %31 = arith.extui %30 : vector<1x8xi1> to vector<1x8xi32>
    %32 = arith.sitofp %31 : vector<1x8xi32> to vector<1x8xf32>
    %cst_9 = arith.constant 0.0204081628 : f32
    %33 = vector.broadcast %cst_9 : f32 to vector<1x8xf32>
    %34 = arith.addf %32, %33 : vector<1x8xf32>
    %35 = arith.addf %11, %17 : vector<1x8xf32>
    %36 = arith.subf %35, %23 : vector<1x8xf32>
    %37 = arith.mulf %36, %34 : vector<1x8xf32>
    %cst_10 = arith.constant 0.000000e+00 : f32
    %38 = vector.broadcast %cst_10 : f32 to vector<1x8xf32>
    %39 = arith.select %9, %37, %38 : vector<1x8xi1>, vector<1x8xf32>
    %40 = vector.shape_cast %39 : vector<1x8xf32> to vector<1x1x8xf32>
    %cst_11 = arith.constant dense<0.000000e+00> : vector<1xf32>
    %41 = vector.multi_reduction <add>, %40, %cst_11 [1, 2] : vector<1x1x8xf32> to vector<1xf32>
    %42 = vector.shape_cast %41 : vector<1xf32> to vector<1x1x1xf32>
    %43 = vector.extract %42[0, 0, 0] : f32 from vector<1x1x1xf32>
    %cst_12 = arith.constant 0.000000e+00 : f32
    %44 = vector.broadcast %cst_12 : f32 to vector<1x8x128xf32>
    %45 = vector.broadcast %43 : f32 to vector<1x8x128xf32>
    %46 = arith.addf %44, %45 : vector<1x8x128xf32>
    %c0_13 = arith.constant 0 : index
    %c0_14 = arith.constant 0 : index
    %c0_15 = arith.constant 0 : index
    %47 = vector.load %arg3[%c0_13, %c0_14, %c0_15] : memref<1x8x128xf32, #tpu.memory_space<vmem>>, vector<1x8x128xf32>
    tpu.vector_store %arg3[%c0_13, %c0_14, %c0_15], %46 {strides = array<i32>} : memref<1x8x128xf32, #tpu.memory_space<vmem>>, vector<1x8x128xf32>,
    return
  }
  func.func @transform_0(%arg0: i32) -> (i32, i32) {
    %c0_i32 = arith.constant 0 : i32
    %c0_i32_0 = arith.constant 0 : i32
    return %arg0, %c0_i32 : i32, i32
  }
  func.func @transform_1(%arg0: i32) -> (i32, i32) {
    %c0_i32 = arith.constant 0 : i32
    %c0_i32_0 = arith.constant 0 : i32
    return %c0_i32, %arg0 : i32, i32
  }
  func.func @transform_2(%arg0: i32) -> (i32, i32, i32) {
    %c0_i32 = arith.constant 0 : i32
    %c0_i32_0 = arith.constant 0 : i32
    %c0_i32_1 = arith.constant 0 : i32
    return %arg0, %c0_i32, %c0_i32_0 : i32, i32, i32
  }
}

</mosaic_0001>

<llo_original>
// kernel: tpu_custom_call.1
$region0: #{tpu_custom_call.1}
  #allocation0 [shape = 'u32[]', space=smem, size = 0x4, offset = 0x4, fixed_abs, tag = 'smem constant byte address 0x4 - core index']
  #allocation1 [shape = 'u32[144,128]{1,0:T(1,128)}', space=vmem, size = 0x12000, scoped, tag = 'internal scratch']
  %s0 = inlined_call_operand.hbm [shape: f32[8,20], index: 0, kind: input, shape index: {}]
  %s1 = inlined_call_operand.vmem [shape: s32[1,8], index: 1, kind: input, shape index: {}]
  %s2 = inlined_call_operand.hbm [shape: f32[1,8,128], index: 2, kind: output, shape index: {}]
  %s3 = sld [smem:[#allocation0]]
  $region22: #{tpu_custom_call.1} parent=0
    _
  %s5 = ssub.s32 1, %s3
  %s6 = scalar_select 0, %s5, %s3
  $region1: #{tpu_custom_call.1} parent=0
    #allocation2 [shape = 'u8[4096]{0}', space=vmem, size = 0x1000, scoped, tag = 'input window, operand 0, single buffered']
    #allocation3 [shape = 's32[1]{0}', space=sflag, size = 0x4, scoped, tag = 'scoped memory for tpu_custom_call.1']
    #allocation4 [shape = 's32[1]{0}', space=sflag, size = 0x4, scoped, tag = 'scoped memory for tpu_custom_call.1']
    #allocation5 [shape = 'u8[4096]{0}', space=vmem, size = 0x1000, scoped, tag = 'output window, operand 0, single buffered']
    %7 = vsyncpa [#allocation3], 0
    %8 = vsyncpa [#allocation4], 0
    // Predicated region
    $region2: #{tpu_custom_call.1} parent=1 // pred_check
      _
    $region3: #{tpu_custom_call.1} parent=1 // pred_check_branch
      %10 = sbr.rel (0) target = $region5
    $region4: #{tpu_custom_call.1} parent=1 // pred_region
      %s12 = ssub.s32 128, 128
      %13 = vsyncadd [#allocation3], %s12
      %s15 = sshll.u32 [#allocation2], 4
      %s16 = int_to_ptr.vmem [resolvable:$true] %s15
      %18 = dma.hbm_to_vmem [thread:$0]  %s0, 128, %s16, [#allocation3]
    $region5: #{tpu_custom_call.1} parent=1 // pred_fallthru
      _
    // Predicated region
    $region6: #{tpu_custom_call.1} parent=1 // pred_check
      _
    $region7: #{tpu_custom_call.1} parent=1 // pred_check_branch
      %20 = sbr.rel (0) target = $region9
    $region8: #{tpu_custom_call.1} parent=1 // pred_region
      _
    $region9: #{tpu_custom_call.1} parent=1 // pred_fallthru
      _
    // Predicated region
    $region10: #{tpu_custom_call.1} parent=1 // pred_check
      _
    $region11: #{tpu_custom_call.1} parent=1 // pred_check_branch
      %22 = sbr.rel (0) target = $region13
    $region12: #{tpu_custom_call.1} parent=1 // pred_region
      %23 = dma.done [#allocation3], 128
    $region13: #{tpu_custom_call.1} parent=1 // pred_fallthru
      _
    %v24 = vld [vmem:[#allocation2] sm:$0xff]
    %25 = vxpose.xlu0.b32.start [1/16] %v24, 128
    %26 = vxpose.xlu0.b32.cont [2/16] 0.0, 128
    %27 = vxpose.xlu0.b32.cont [3/16] 0.0, 128
    %28 = vxpose.xlu0.b32.cont [4/16] 0.0, 128
    %29 = vxpose.xlu0.b32.cont [5/16] 0.0, 128
    %30 = vxpose.xlu0.b32.cont [6/16] 0.0, 128
    %31 = vxpose.xlu0.b32.cont [7/16] 0.0, 128
    %32 = vxpose.xlu0.b32.cont [8/16] 0.0, 128
    %33 = vxpose.xlu0.b32.cont [9/16] 0.0, 128
    %34 = vxpose.xlu0.b32.cont [10/16] 0.0, 128
    %35 = vxpose.xlu0.b32.cont [11/16] 0.0, 128
    %36 = vxpose.xlu0.b32.cont [12/16] 0.0, 128
    %37 = vxpose.xlu0.b32.cont [13/16] 0.0, 128
    %38 = vxpose.xlu0.b32.cont [14/16] 0.0, 128
    %39 = vxpose.xlu0.b32.cont [15/16] 0.0, 128
    %40 = vxpose.xlu0.b32.end [16/16] 0.0, 128
    %v41 = vpop.trf.xlu0
    %v42 = vpop.trf.xlu0
    %v43 = vpop.trf.xlu0
    %v44 = vpop.trf.xlu0
    %v45 = vpop.trf.xlu0
    %v46 = vpop.trf.xlu0
    %v47 = vpop.trf.xlu0
    %v48 = vpop.trf.xlu0
    %v49 = vpop.trf.xlu0
    %v50 = vpop.trf.xlu0
    %v51 = vpop.trf.xlu0
    %v52 = vpop.trf.xlu0
    %v53 = vpop.trf.xlu0
    %v54 = vpop.trf.xlu0
    %v55 = vpop.trf.xlu0
    %v56 = vpop.trf.xlu0
    %v57 = vld [vmem:[%s1] sm:$0x1]
    %v58 = vlaneseq
    %v59 = vshrl.u32 %v58, 7
    %v60 = vadd.s32 %v59, 8
    %v61 = vadd.s32 %v59, 16
    %v62 = vlaneseq
    %v63 = vand.u32 %v62, 127
    %s64 = smul.u32 0, 8
    %v65 = vstv %s64
    %v66 = vadd.s32 %v63, %v65
    %vm67 = vcmp.lt.s32.totalorder %v66, 8
    %vm68 = vcmask 64512
    %v69 = vsel %vm68, %v41, -inf
    %v70 = vsel %vm68, %v42, -inf
    %vm71 = vcmask 60416
    %v72 = vsel %vm71, %v43, -inf
    %v73 = vmax.f32 %v69, %v70
    %v74 = vmax.f32 %v73, %v72
    %v75 = vrot.slane %v74, 4
    %v76 = vmax.f32 %v74, %v75
    %v77 = vrot.slane %v76, 2
    %v78 = vmax.f32 %v76, %v77
    %v79 = vrot.slane %v78, 1
    %v80 = vmax.f32 %v78, %v79
    %v81 = vsub.f32 %v41, %v80
    %v82 = vsub.f32 %v42, %v80
    %v83 = vsub.f32 %v43, %v80
    %v84 = vmul.f32 %v81, 1.442695
    %v85 = vpow.pop %v84
    %v86 = vmul.f32 %v82, 1.442695
    %v87 = vpow.pop %v86
    %v88 = vmul.f32 %v83, 1.442695
    %v89 = vpow.pop %v88
    %v90 = vsel %vm68, %v85, 0.0
    %v91 = vsel %vm68, %v87, 0.0
    %v92 = vadd.f32 %v90, %v91
    %v93 = vsel %vm71, %v89, 0.0
    %v94 = vadd.f32 %v92, %v93
    %v95 = vrot.slane %v94, 4
    %v96 = vadd.f32 %v94, %v95
    %v97 = vrot.slane %v96, 2
    %v98 = vadd.f32 %v96, %v97
    %v99 = vrot.slane %v98, 1
    %v100 = vadd.f32 %v98, %v99
    %v101 = vlog2.pop %v100
    %v102 = vmul.f32 %v101, 0.6931472
    %v103 = vlaneseq
    %v104 = vshrl.u32 %v103, 7
    %v105 = vsub.s32 0, %v104
    %v106 = vrot.slane %v57, %v105
    %vm107 = vcmp.eq.s32.totalorder %v59, %v106
    %vm108 = vcmp.eq.s32.totalorder %v60, %v106
    %vm109 = vcmp.eq.s32.totalorder %v61, %v106
    %v110 = vsel %vm107, %v41, 0.0
    %v111 = vsel %vm108, %v42, 0.0
    %v112 = vsel %vm109, %v43, 0.0
    %v113 = vsel %vm68, %v110, 0.0
    %v114 = vsel %vm68, %v111, 0.0
    %v115 = vadd.f32 %v113, %v114
    %v116 = vsel %vm71, %v112, 0.0
    %v117 = vadd.f32 %v115, %v116
    %v118 = vrot.slane %v117, 4
    %v119 = vadd.f32 %v117, %v118
    %v120 = vrot.slane %v119, 2
    %v121 = vadd.f32 %v119, %v120
    %v122 = vrot.slane %v121, 1
    %v123 = vadd.f32 %v121, %v122
    %vm124 = vcmp.le.s32.totalorder %v59, %v106
    %vm125 = vcmp.le.s32.totalorder %v60, %v106
    %vm126 = vcmp.le.s32.totalorder %v61, %v106
    %v127 = vsel %vm124, %v41, -inf
    %v128 = vsel %vm125, %v42, -inf
    %v129 = vsel %vm126, %v43, -inf
    %v130 = vsel %vm68, %v127, -inf
    %v131 = vsel %vm68, %v128, -inf
    %v132 = vsel %vm71, %v129, -inf
    %v133 = vmax.f32 %v130, %v131
    %v134 = vmax.f32 %v133, %v132
    %v135 = vrot.slane %v134, 4
    %v136 = vmax.f32 %v134, %v135
    %v137 = vrot.slane %v136, 2
    %v138 = vmax.f32 %v136, %v137
    %v139 = vrot.slane %v138, 1
    %v140 = vmax.f32 %v138, %v139
    %vm141 = vcmp.lt.f32.partialorder %v140, %v80
    %v142 = vsel %vm141, 1, 0
    %v143 = vcvt.s32.f32 %v142
    %v144 = vadd.f32 %v143, 0.020408163
    %v145 = vadd.f32 %v80, %v102
    %v146 = vsub.f32 %v145, %v123
    %v147 = vmul.f32 %v146, %v144
    %v148 = vsel %vm67, %v147, 0.0
    %vm149 = vcmask 57344
    %v150 = vsel %vm149, %v148, 0.0
    %151 = vadd.xlane.f32.xlu0 %v150
    %v152 = vpop.xlane.xlu0 %151
    %v153 = vrot.slane %v152, 4
    %v154 = vadd.f32 %v152, %v153
    %v155 = vrot.slane %v154, 2
    %v156 = vadd.f32 %v154, %v155
    %v157 = vrot.slane %v156, 1
    %v158 = vadd.f32 %v156, %v157
    %s159 = vtos %v158
    %v160 = vstv %s159
    %v161 = vadd.f32 %v160, 0.0
    %162 = vst [vmem:[#allocation5] sm:$0xff] %v161
    // Predicated region
    $region14: #{tpu_custom_call.1} parent=1 // pred_check
      _
    $region15: #{tpu_custom_call.1} parent=1 // pred_check_branch
      %164 = sbr.rel (0) target = $region17
    $region16: #{tpu_custom_call.1} parent=1 // pred_region
      %s166 = ssub.s32 128, 128
      %167 = vsyncadd [#allocation4], %s166
      %s169 = sshll.u32 [#allocation5], 4
      %s170 = int_to_ptr.vmem [resolvable:$true] %s169
      %172 = dma.vmem_to_hbm [thread:$0]  %s170, 128, %s2, [#allocation4]
    $region17: #{tpu_custom_call.1} parent=1 // pred_fallthru
      _
    // Predicated region
    $region18: #{tpu_custom_call.1} parent=1 // pred_check
      _
    $region19: #{tpu_custom_call.1} parent=1 // pred_check_branch
      %174 = sbr.rel (0) target = $region21
    $region20: #{tpu_custom_call.1} parent=1 // pred_region
      %175 = dma.done [#allocation4], 128
    $region21: #{tpu_custom_call.1} parent=1 // pred_fallthru
      _
    %176 = vsyncpa [#allocation3], 1
    %177 = vsyncpa [#allocation4], 1

</llo_original>
